<compile_context>
chip_gen: v7x
topology: tpu7x:2x2x1
jax: 0.10.0
libtpu: 0.0.40
codegen_flags: <defaults>
</compile_context>

<pallas_src>
import math

import numpy as np

import jax
import jax.numpy as jnp
from jax.experimental import pallas as pl
from jax.experimental.pallas import tpu as pltpu


# --------------------------------------------------------------------------
# Pallas kernel: fused (batch-tiles x steps) denoiser MLP + Euler update
# --------------------------------------------------------------------------
def sampler_kernel(coef_ref, x_ref, eps_ref, w1_ref, b1_ref, w2_ref, b2_ref,
                   out_ref):
    """Grid = (batch tile i, diffusion step s).

    coef_ref : SMEM f32[3*steps]  -> per-step [1-tau, tau, sigma_s*sqrt(tau)]
    x_ref    : VMEM f32[TM, D]    -> x_1 for this batch tile
    eps_ref  : VMEM f32[TM, D]    -> Gaussian noise for (step s, tile i)
    w1/b1    : VMEM               -> denoiser layer 1 (D -> H), bf16 W, f32 b
    w2/b2    : VMEM               -> denoiser layer 2 (H -> D), bf16 W, f32 b
    out_ref  : VMEM f32[TM, D]    -> carried state across steps; final x_0
    """
    s = pl.program_id(1)          # diffusion step (innermost axis)

    # First step of each batch tile: initialise the carried state from x_t.
    @pl.when(s == 0)
    def _():
        out_ref[...] = x_ref[...]

    x = out_ref[...]                                    # f32 carried state

    # Synthetic denoiser d(x_t) ~= E[x | x_t]: 2-layer MLP with GELU.
    # bf16 matmul inputs, f32 accumulation (MXU-friendly on v5e/v6e/v7x).
    h = jnp.dot(x.astype(jnp.bfloat16), w1_ref[...],
                preferred_element_type=jnp.float32) + b1_ref[...]
    h = jax.nn.gelu(h)
    d = jnp.dot(h.astype(jnp.bfloat16), w2_ref[...],
                preferred_element_type=jnp.float32) + b2_ref[...]

    # Euler-Maruyama update with host-precomputed coefficients:
    #   xs = (1 - tau) * xt + tau * d(xt) + sigma_s * sqrt(tau) * eps
    a = coef_ref[3 * s + 0]
    b = coef_ref[3 * s + 1]
    c = coef_ref[3 * s + 2]
    out_ref[...] = a * x + b * d + c * eps_ref[...]


def _sampler_pallas(x, eps, w1, b1, w2, b2, coef, *, tm):
    """One pallas_call covering all sampling steps and all batch tiles."""
    b_pad, d_dim = x.shape
    h_dim = w1.shape[1]
    steps = eps.shape[0]
    nbt = b_pad // tm

    cost = pl.CostEstimate(
        flops=2 * 2 * b_pad * d_dim * h_dim * steps,      # two matmuls / step
        transcendentals=b_pad * h_dim * steps,            # gelu
        bytes_accessed=4 * (2 * b_pad * d_dim             # x in, out
                            + steps * b_pad * d_dim       # noise
                            + d_dim + h_dim)
        + 2 * (2 * d_dim * h_dim),                        # bf16 weights
    )

    return pl.pallas_call(
        sampler_kernel,
        out_shape=jax.ShapeDtypeStruct((b_pad, d_dim), jnp.float32),
        grid=(nbt, steps),
        in_specs=[
            pl.BlockSpec(memory_space=pltpu.SMEM),                  # coef (1-D)
            pl.BlockSpec((tm, d_dim), lambda i, s: (i, 0)),         # x_1 tile
            pl.BlockSpec((None, tm, d_dim), lambda i, s: (s, i, 0)),  # noise
            pl.BlockSpec((d_dim, h_dim), lambda i, s: (0, 0)),      # W1 (resident)
            pl.BlockSpec((1, h_dim), lambda i, s: (0, 0)),          # b1
            pl.BlockSpec((h_dim, d_dim), lambda i, s: (0, 0)),      # W2 (resident)
            pl.BlockSpec((1, d_dim), lambda i, s: (0, 0)),          # b2
        ],
        out_specs=pl.BlockSpec((tm, d_dim), lambda i, s: (i, 0)),
        compiler_params=pltpu.CompilerParams(
            dimension_semantics=("parallel", "arbitrary")),
        input_output_aliases={1: 0},        # reuse x's HBM buffer for output
        cost_estimate=cost,
    )(coef, x, eps, w1, b1, w2, b2)


# --------------------------------------------------------------------------
# Sampler module (glue in plain JAX / numpy; no per-step host syncs)
# --------------------------------------------------------------------------
def _round_up(v, m):
    return -(-v // m) * m


class Sampler:
    """JAX/Pallas port of poseidon.diffusion.sampler.Sampler.

    forward() in the PyTorch class is abstract; this implements the canonical
    Euler-Maruyama sampler described in its docstring with a synthetic
    denoiser (2-layer GELU MLP) and a linear noise schedule.
    """

    def __init__(self, dimensions, hidden=128, sigma_max=1.0, sigma_min=1e-3,
                 key=jax.random.PRNGKey(0)):
        self.C, self.X, self.Y = dimensions
        self.D = self.C * self.X * self.Y
        self.steps = 1
        self.sigma_max = sigma_max
        self.sigma_min = sigma_min

        # Lane-dense hidden width: pad to a multiple of 128; padded units are
        # exactly zero-contributing so the math equals a `hidden`-unit MLP.
        # (On v6e/v7x a 256-wide hidden would fill the 2x256x256 MXU; 128 is
        # the native width on v5e, so keep 128 for portability.)
        self.H = _round_up(hidden, 128)

        k1, k2 = jax.random.split(key)
        w1 = jax.random.normal(k1, (self.D, hidden), jnp.float32) / jnp.sqrt(
            float(self.D))
        w2 = jax.random.normal(k2, (hidden, self.D), jnp.float32) / jnp.sqrt(
            float(hidden))
        # Weights stored bf16 (matmul inputs); biases stay f32.
        self.w1 = jnp.pad(w1, ((0, 0), (0, self.H - hidden))).astype(jnp.bfloat16)
        self.b1 = jnp.zeros((1, self.H), jnp.float32)
        self.w2 = jnp.pad(w2, ((0, self.H - hidden), (0, 0))).astype(jnp.bfloat16)
        self.b2 = jnp.zeros((1, self.D), jnp.float32)

    def schedule(self, t):
        """Linear noise schedule sigma(t), t in [0, 1] (numpy-friendly)."""
        return self.sigma_min + (self.sigma_max - self.sigma_min) * t

    def forward(self, x1, key):
        """x1: (*, D) noisy tensor from p(x1) -> (*, D) sample from p(x0|x1)."""
        lead = x1.shape[:-1]
        x = x1.reshape(-1, self.D).astype(jnp.float32)
        b = x.shape[0]

        # Batch tiling: TM multiple of 8 (sublanes), capped at 256 rows so the
        # double-buffered tile footprint fits every generation's scoped-VMEM
        # default (incl. v7x 64 MiB physical VMEM).  When the batch allows,
        # force >= 2 tiles so the "parallel" axis shards across v7x's 2 TCs.
        b_pad = _round_up(b, 8)
        if b_pad >= 16:
            tm = min(256, _round_up(-(-b_pad // 2), 8))
        else:
            tm = b_pad
        b_pad = _round_up(b_pad, tm)
        if b_pad != b:
            x = jnp.pad(x, ((0, b_pad - b), (0, 0)))

        # Per-step coefficients, precomputed on host (no device->host sync),
        # flattened to 1-D for SMEM: [a0, b0, c0, a1, b1, c1, ...].
        ts = np.linspace(1.0, 0.0, self.steps + 1, dtype=np.float64)
        tau = ts[:-1] - ts[1:]
        sigma_s = np.asarray(self.schedule(ts[1:]), dtype=np.float64)
        coef = np.stack([1.0 - tau, tau, sigma_s * np.sqrt(tau)], axis=-1)
        coef = jnp.asarray(coef.reshape(-1), dtype=jnp.float32)   # (3*steps,)

        # Gaussian noise, one (B, D) slab per step, streamed into the kernel.
        # TODO(synk): replace with on-chip pltpu PRNG + Box-Muller on real TPU
        # (no CPU/interpret lowering exists for prng_seed/prng_random_bits).
        eps = jax.random.normal(key, (self.steps, b_pad, self.D), jnp.float32)

        out = _sampler_pallas(x, eps, self.w1, self.b1, self.w2, self.b2,
                              coef, tm=tm)
        return out[:b].reshape(*lead, self.D)

    # TODO(synk): PyTorch forward() is @abstractmethod; concrete subclasses
    # (specific SDE/ODE samplers, real PoseidonDenoiser) would replace the
    # synthetic MLP denoiser and the step schedule above.


# --------------------------------------------------------------------------
if __name__ == "__main__":
    key = jax.random.PRNGKey(0)
    B, C, X, Y = 2, 4, 16, 16          # small shapes; D = C*X*Y = 1024
    dims = (C, X, Y)

    sampler = Sampler(dims, hidden=128, key=jax.random.PRNGKey(0))

    k_x, k_fwd = jax.random.split(key)
    x1 = jax.random.normal(k_x, (B, C * X * Y), jnp.float32)   # (*, D)

    out = sampler.forward(x1, k_fwd)
    out = jax.block_until_ready(out)

    assert out.shape == (B, C * X * Y)
    assert out.dtype == jnp.float32
    assert bool(jnp.all(jnp.isfinite(out)))
    print("KERNEL_OK")
</pallas_src>

<mosaic_0001>
module attributes {stable_mosaic.version = 11 : i64} {
  func.func @sampler_kernel(%arg0: i32, %arg1: i32, %arg2: memref<3xf32, #tpu.memory_space<smem>>, %arg3: memref<8x1024xf32, #tpu.memory_space<vmem>>, %arg4: memref<1x8x1024xf32, #tpu.memory_space<vmem>>, %arg5: memref<1024x128xbf16, #tpu.memory_space<vmem>>, %arg6: memref<1x128xf32, #tpu.memory_space<vmem>>, %arg7: memref<128x1024xbf16, #tpu.memory_space<vmem>>, %arg8: memref<1x1024xf32, #tpu.memory_space<vmem>>, %arg9: memref<8x1024xf32, #tpu.memory_space<vmem>>) attributes {dimension_semantics = [#tpu.dimension_semantics<parallel>, #tpu.dimension_semantics<arbitrary>], iteration_bounds = array<i64: 1, 1>, scalar_prefetch = 0 : i64, scratch_operands = 0 : i64, tpu.core_type = #tpu.core_type<tc>, window_params = [{transform_indices = @transform_0, window_bounds = array<i64: 3>}, {transform_indices = @transform_1, window_bounds = array<i64: 8, 1024>}, {transform_indices = @transform_2, window_bounds = array<i64: 1, 8, 1024>}, {pipeline_mode = #tpu.pipeline_mode<synchronous>, transform_indices = @transform_3, window_bounds = array<i64: 1024, 128>}, {pipeline_mode = #tpu.pipeline_mode<synchronous>, transform_indices = @transform_4, window_bounds = array<i64: 1, 128>}, {pipeline_mode = #tpu.pipeline_mode<synchronous>, transform_indices = @transform_5, window_bounds = array<i64: 128, 1024>}, {pipeline_mode = #tpu.pipeline_mode<synchronous>, transform_indices = @transform_6, window_bounds = array<i64: 1, 1024>}, {transform_indices = @transform_7, window_bounds = array<i64: 8, 1024>}]} {
    %c0_i32 = arith.constant 0 : i32
    %0 = arith.cmpi eq, %arg1, %c0_i32 : i32
    %1 = arith.extui %0 : i1 to i32
    %c0_i32_0 = arith.constant 0 : i32
    %2 = arith.cmpi ne, %1, %c0_i32_0 : i32
    scf.if %2 {
      %c0_23 = arith.constant 0 : index
      %c0_24 = arith.constant 0 : index
      %52 = vector.load %arg3[%c0_23, %c0_24] : memref<8x1024xf32, #tpu.memory_space<vmem>>, vector<8x1024xf32>
      %c0_25 = arith.constant 0 : index
      %c0_26 = arith.constant 0 : index
      %53 = vector.load %arg9[%c0_25, %c0_26] : memref<8x1024xf32, #tpu.memory_space<vmem>>, vector<8x1024xf32>
      tpu.vector_store %arg9[%c0_25, %c0_26], %52 {strides = array<i32>} : memref<8x1024xf32, #tpu.memory_space<vmem>>, vector<8x1024xf32>,
    } else {
    }
    %c0 = arith.constant 0 : index
    %c0_1 = arith.constant 0 : index
    %3 = vector.load %arg9[%c0, %c0_1] : memref<8x1024xf32, #tpu.memory_space<vmem>>, vector<8x1024xf32>
    %4 = arith.truncf %3 : vector<8x1024xf32> to vector<8x1024xbf16>
    %c0_2 = arith.constant 0 : index
    %c0_3 = arith.constant 0 : index
    %5 = vector.load %arg5[%c0_2, %c0_3] : memref<1024x128xbf16, #tpu.memory_space<vmem>>, vector<1024x128xbf16>
    %cst = arith.constant dense<0.000000e+00> : vector<8x128xf32>
    %6 = tpu.matmul %4, %5, %cst {dimension_numbers = #tpu.dot_dimension_numbers<[1], [0], [0], [1], [0, 0, 1, 1], [], []>} : vector<8x1024xbf16>, vector<1024x128xbf16>, vector<8x128xf32> -> vector<8x128xf32>
    %c0_4 = arith.constant 0 : index
    %c0_5 = arith.constant 0 : index
    %7 = vector.load %arg6[%c0_4, %c0_5] : memref<1x128xf32, #tpu.memory_space<vmem>>, vector<1x128xf32>
    %8 = vector.broadcast %7 : vector<1x128xf32> to vector<8x128xf32>
    %9 = arith.addf %6, %8 : vector<8x128xf32>
    %10 = arith.mulf %9, %9 : vector<8x128xf32>
    %11 = arith.mulf %9, %10 : vector<8x128xf32>
    %cst_6 = arith.constant 4.471500e-02 : f32
    %12 = vector.broadcast %cst_6 : f32 to vector<8x128xf32>
    %13 = arith.mulf %12, %11 : vector<8x128xf32>
    %14 = arith.addf %9, %13 : vector<8x128xf32>
    %cst_7 = arith.constant 0.797884583 : f32
    %15 = vector.broadcast %cst_7 : f32 to vector<8x128xf32>
    %16 = arith.mulf %15, %14 : vector<8x128xf32>
    %17 = math.tanh %16 : vector<8x128xf32>
    %cst_8 = arith.constant 1.000000e+00 : f32
    %18 = vector.broadcast %cst_8 : f32 to vector<8x128xf32>
    %19 = arith.addf %18, %17 : vector<8x128xf32>
    %cst_9 = arith.constant 5.000000e-01 : f32
    %20 = vector.broadcast %cst_9 : f32 to vector<8x128xf32>
    %21 = arith.mulf %20, %19 : vector<8x128xf32>
    %22 = arith.mulf %9, %21 : vector<8x128xf32>
    %23 = arith.truncf %22 : vector<8x128xf32> to vector<8x128xbf16>
    %c0_10 = arith.constant 0 : index
    %c0_11 = arith.constant 0 : index
    %24 = vector.load %arg7[%c0_10, %c0_11] : memref<128x1024xbf16, #tpu.memory_space<vmem>>, vector<128x1024xbf16>
    %cst_12 = arith.constant dense<0.000000e+00> : vector<8x1024xf32>
    %25 = tpu.matmul %23, %24, %cst_12 {dimension_numbers = #tpu.dot_dimension_numbers<[1], [0], [0], [1], [0, 0, 1, 1], [], []>} : vector<8x128xbf16>, vector<128x1024xbf16>, vector<8x1024xf32> -> vector<8x1024xf32>
    %c0_13 = arith.constant 0 : index
    %c0_14 = arith.constant 0 : index
    %26 = vector.load %arg8[%c0_13, %c0_14] : memref<1x1024xf32, #tpu.memory_space<vmem>>, vector<1x1024xf32>
    %27 = vector.broadcast %26 : vector<1x1024xf32> to vector<8x1024xf32>
    %28 = arith.addf %25, %27 : vector<8x1024xf32>
    %c3_i32 = arith.constant 3 : i32
    %29 = arith.muli %c3_i32, %arg1 : i32
    %c0_i32_15 = arith.constant 0 : i32
    %30 = arith.addi %29, %c0_i32_15 : i32
    %31 = arith.index_cast %30 : i32 to index
    %32 = memref.load %arg2[%31] : memref<3xf32, #tpu.memory_space<smem>>
    %c3_i32_16 = arith.constant 3 : i32
    %33 = arith.muli %c3_i32_16, %arg1 : i32
    %c1_i32 = arith.constant 1 : i32
    %34 = arith.addi %33, %c1_i32 : i32
    %35 = arith.index_cast %34 : i32 to index
    %36 = memref.load %arg2[%35] : memref<3xf32, #tpu.memory_space<smem>>
    %c3_i32_17 = arith.constant 3 : i32
    %37 = arith.muli %c3_i32_17, %arg1 : i32
    %c2_i32 = arith.constant 2 : i32
    %38 = arith.addi %37, %c2_i32 : i32
    %39 = arith.index_cast %38 : i32 to index
    %40 = memref.load %arg2[%39] : memref<3xf32, #tpu.memory_space<smem>>
    %41 = vector.broadcast %32 : f32 to vector<8x1024xf32>
    %42 = arith.mulf %41, %3 : vector<8x1024xf32>
    %43 = vector.broadcast %36 : f32 to vector<8x1024xf32>
    %44 = arith.mulf %43, %28 : vector<8x1024xf32>
    %45 = arith.addf %42, %44 : vector<8x1024xf32>
    %c0_18 = arith.constant 0 : index
    %c0_19 = arith.constant 0 : index
    %c0_20 = arith.constant 0 : index
    %46 = vector.load %arg4[%c0_18, %c0_19, %c0_20] : memref<1x8x1024xf32, #tpu.memory_space<vmem>>, vector<1x8x1024xf32>
    %47 = vector.shape_cast %46 : vector<1x8x1024xf32> to vector<8x1024xf32>
    %48 = vector.broadcast %40 : f32 to vector<8x1024xf32>
    %49 = arith.mulf %48, %47 : vector<8x1024xf32>
    %50 = arith.addf %45, %49 : vector<8x1024xf32>
    %c0_21 = arith.constant 0 : index
    %c0_22 = arith.constant 0 : index
    %51 = vector.load %arg9[%c0_21, %c0_22] : memref<8x1024xf32, #tpu.memory_space<vmem>>, vector<8x1024xf32>
    tpu.vector_store %arg9[%c0_21, %c0_22], %50 {strides = array<i32>} : memref<8x1024xf32, #tpu.memory_space<vmem>>, vector<8x1024xf32>,
    return
  }
  func.func @transform_0(%arg0: i32, %arg1: i32) -> i32 {
    %c0_i32 = arith.constant 0 : i32
    %c0_i32_0 = arith.constant 0 : i32
    return %c0_i32 : i32
  }
  func.func @transform_1(%arg0: i32, %arg1: i32) -> (i32, i32) {
    %c0_i32 = arith.constant 0 : i32
    %c0_i32_0 = arith.constant 0 : i32
    return %arg0, %c0_i32 : i32, i32
  }
  func.func @transform_2(%arg0: i32, %arg1: i32) -> (i32, i32, i32) {
    %c0_i32 = arith.constant 0 : i32
    %c0_i32_0 = arith.constant 0 : i32
    return %arg1, %arg0, %c0_i32 : i32, i32, i32
  }
  func.func @transform_3(%arg0: i32, %arg1: i32) -> (i32, i32) {
    %c0_i32 = arith.constant 0 : i32
    %c0_i32_0 = arith.constant 0 : i32
    %c0_i32_1 = arith.constant 0 : i32
    return %c0_i32, %c0_i32_0 : i32, i32
  }
  func.func @transform_4(%arg0: i32, %arg1: i32) -> (i32, i32) {
    %c0_i32 = arith.constant 0 : i32
    %c0_i32_0 = arith.constant 0 : i32
    %c0_i32_1 = arith.constant 0 : i32
    return %c0_i32, %c0_i32_0 : i32, i32
  }
  func.func @transform_5(%arg0: i32, %arg1: i32) -> (i32, i32) {
    %c0_i32 = arith.constant 0 : i32
    %c0_i32_0 = arith.constant 0 : i32
    %c0_i32_1 = arith.constant 0 : i32
    return %c0_i32, %c0_i32_0 : i32, i32
  }
  func.func @transform_6(%arg0: i32, %arg1: i32) -> (i32, i32) {
    %c0_i32 = arith.constant 0 : i32
    %c0_i32_0 = arith.constant 0 : i32
    %c0_i32_1 = arith.constant 0 : i32
    return %c0_i32, %c0_i32_0 : i32, i32
  }
  func.func @transform_7(%arg0: i32, %arg1: i32) -> (i32, i32) {
    %c0_i32 = arith.constant 0 : i32
    %c0_i32_0 = arith.constant 0 : i32
    return %arg0, %c0_i32 : i32, i32
  }
}

</mosaic_0001>

<llo_original>
// kernel: tpu_custom_call.1
$region0: #{tpu_custom_call.1}
  #allocation0 [shape = 'u32[]', space=smem, size = 0x4, offset = 0x4, fixed_abs, tag = 'smem constant byte address 0x4 - core index']
  #allocation1 [shape = 'u32[144,128]{1,0:T(1,128)}', space=vmem, size = 0x12000, scoped, tag = 'internal scratch']
  %s0 = inlined_call_operand.vmem [shape: f32[3], index: 0, kind: input, shape index: {}]
  %s1 = inlined_call_operand.hbm [shape: f32[8,1024], index: 1, kind: input, shape index: {}, may-alias: {1,7}]
  %s2 = inlined_call_operand.vmem [shape: f32[1,8,1024], index: 2, kind: input, shape index: {}]
  %s3 = inlined_call_operand.hbm [shape: bf16[1024,128], index: 3, kind: input, shape index: {}]
  %s4 = inlined_call_operand.vmem [shape: f32[1,128], index: 4, kind: input, shape index: {}]
  %s5 = inlined_call_operand.hbm [shape: bf16[128,1024], index: 5, kind: input, shape index: {}]
  %s6 = inlined_call_operand.vmem [shape: f32[1,1024], index: 6, kind: input, shape index: {}]
  %s7 = inlined_call_operand.hbm [shape: f32[8,1024], index: 7, kind: output, shape index: {}, may-alias: {1,7}]
  %s8 = sld [smem:[#allocation0]]
  $region58: #{tpu_custom_call.1} parent=0
    _
  %s10 = ssub.s32 1, %s8
  %s11 = scalar_select 0, %s10, %s8
  $region1: #{tpu_custom_call.1} parent=0
    #allocation2 [shape = 'u8[512]{0}', space=smem, size = 0x200, scoped, tag = 'input window, operand 0, single buffered']
    #allocation3 [shape = 's32[1]{0}', space=sflag, size = 0x4, scoped, tag = 'scoped memory for tpu_custom_call.1']
    #allocation4 [shape = 's32[1]{0}', space=sflag, size = 0x4, scoped, tag = 'scoped memory for tpu_custom_call.1']
    #allocation5 [shape = 's32[1]{0}', space=sflag, size = 0x4, scoped, tag = 'scoped memory for tpu_custom_call.1']
    #allocation6 [shape = 'u8[32768]{0}', space=vmem, size = 0x8000, scoped, tag = 'input window, operand 1, single buffered']
    #allocation7 [shape = 'u8[262144]{0}', space=vmem, size = 0x40000, scoped, tag = 'input window, operand 3, single buffered']
    #allocation8 [shape = 's32[1]{0}', space=sflag, size = 0x4, scoped, tag = 'scoped memory for tpu_custom_call.1']
    #allocation9 [shape = 'u8[262144]{0}', space=vmem, size = 0x40000, scoped, tag = 'input window, operand 5, single buffered']
    #allocation10 [shape = 'u8[32768]{0}', space=vmem, size = 0x8000, scoped, tag = 'output window, operand 0, single buffered']
    %12 = vsyncpa [#allocation5], 0
    %13 = vsyncpa [#allocation3], 0
    %14 = vsyncpa [#allocation8], 0
    %15 = vsyncpa [#allocation4], 0
    // Predicated region
    $region2: #{tpu_custom_call.1} parent=1 // pred_check
      _
    $region3: #{tpu_custom_call.1} parent=1 // pred_check_branch
      %17 = sbr.rel (0) target = $region5
    $region4: #{tpu_custom_call.1} parent=1 // pred_region
      %s19 = ssub.s32 16, 16
      %20 = vsyncadd [#allocation5], %s19
      %s22 = sshll.u32 %s0, 4
      %s23 = int_to_ptr.vmem [resolvable:$true] %s22
      %25 = dma.vmem_to_smem %s23, 16, [#allocation2], [#allocation5]
    $region5: #{tpu_custom_call.1} parent=1 // pred_fallthru
      _
    // Predicated region
    $region6: #{tpu_custom_call.1} parent=1 // pred_check
      _
    $region7: #{tpu_custom_call.1} parent=1 // pred_check_branch
      %27 = sbr.rel (0) target = $region9
    $region8: #{tpu_custom_call.1} parent=1 // pred_region
      %s29 = ssub.s32 1024, 1024
      %30 = vsyncadd [#allocation3], %s29
      %s32 = sshll.u32 [#allocation6], 4
      %s33 = int_to_ptr.vmem [resolvable:$true] %s32
      %35 = dma.hbm_to_vmem [thread:$0]  %s1, 1024, %s33, [#allocation3]
    $region9: #{tpu_custom_call.1} parent=1 // pred_fallthru
      _
    // Predicated region
    $region10: #{tpu_custom_call.1} parent=1 // pred_check
      _
    $region11: #{tpu_custom_call.1} parent=1 // pred_check_branch
      %37 = sbr.rel (0) target = $region13
    $region12: #{tpu_custom_call.1} parent=1 // pred_region
      _
    $region13: #{tpu_custom_call.1} parent=1 // pred_fallthru
      _
    // Predicated region
    $region14: #{tpu_custom_call.1} parent=1 // pred_check
      _
    $region15: #{tpu_custom_call.1} parent=1 // pred_check_branch
      %39 = sbr.rel (0) target = $region17
    $region16: #{tpu_custom_call.1} parent=1 // pred_region
      %s41 = ssub.s32 8192, 8192
      %42 = vsyncadd [#allocation8], %s41
      %s43 = sshll.u32 [#allocation7], 4
      %s44 = int_to_ptr.vmem [resolvable:$true] %s43
      %49 = dma.hbm_to_vmem [thread:$0]  %s3, 8192, %s44, [#allocation8], 64, 64, 4
    $region17: #{tpu_custom_call.1} parent=1 // pred_fallthru
      _
    // Predicated region
    $region18: #{tpu_custom_call.1} parent=1 // pred_check
      _
    $region19: #{tpu_custom_call.1} parent=1 // pred_check_branch
      %51 = sbr.rel (0) target = $region21
    $region20: #{tpu_custom_call.1} parent=1 // pred_region
      _
    $region21: #{tpu_custom_call.1} parent=1 // pred_fallthru
      _
    // Predicated region
    $region22: #{tpu_custom_call.1} parent=1 // pred_check
      _
    $region23: #{tpu_custom_call.1} parent=1 // pred_check_branch
      %53 = sbr.rel (0) target = $region25
    $region24: #{tpu_custom_call.1} parent=1 // pred_region
      %s55 = ssub.s32 8192, 8192
      %56 = vsyncadd [#allocation8], %s55
      %s57 = sshll.u32 [#allocation9], 4
      %s58 = int_to_ptr.vmem [resolvable:$true] %s57
      %63 = dma.hbm_to_vmem [thread:$0]  %s5, 8192, %s58, [#allocation8], 512, 512, 32
    $region25: #{tpu_custom_call.1} parent=1 // pred_fallthru
      _
    // Predicated region
    $region26: #{tpu_custom_call.1} parent=1 // pred_check
      _
    $region27: #{tpu_custom_call.1} parent=1 // pred_check_branch
      %65 = sbr.rel (0) target = $region29
    $region28: #{tpu_custom_call.1} parent=1 // pred_region
      _
    $region29: #{tpu_custom_call.1} parent=1 // pred_fallthru
      _
    // Predicated region
    $region30: #{tpu_custom_call.1} parent=1 // pred_check
      _
    $region31: #{tpu_custom_call.1} parent=1 // pred_check_branch
      %67 = sbr.rel (0) target = $region33
    $region32: #{tpu_custom_call.1} parent=1 // pred_region
      %68 = dma.done [#allocation5], 16
    $region33: #{tpu_custom_call.1} parent=1 // pred_fallthru
      _
    // Predicated region
    $region34: #{tpu_custom_call.1} parent=1 // pred_check
      _
    $region35: #{tpu_custom_call.1} parent=1 // pred_check_branch
      %70 = sbr.rel (0) target = $region37
    $region36: #{tpu_custom_call.1} parent=1 // pred_region
      %71 = dma.done [#allocation3], 1024
    $region37: #{tpu_custom_call.1} parent=1 // pred_fallthru
      _
    // Predicated region
    $region38: #{tpu_custom_call.1} parent=1 // pred_check
      _
    $region39: #{tpu_custom_call.1} parent=1 // pred_check_branch
      %73 = sbr.rel (0) target = $region41
    $region40: #{tpu_custom_call.1} parent=1 // pred_region
      %74 = dma.done [#allocation8], 8192
    $region41: #{tpu_custom_call.1} parent=1 // pred_fallthru
      _
    // Predicated region
    $region42: #{tpu_custom_call.1} parent=1 // pred_check
      _
    $region43: #{tpu_custom_call.1} parent=1 // pred_check_branch
      %76 = sbr.rel (0) target = $region45
    $region44: #{tpu_custom_call.1} parent=1 // pred_region
      %77 = dma.done [#allocation8], 8192
    $region45: #{tpu_custom_call.1} parent=1 // pred_fallthru
      _
    %78 = sfence
    %p80 = scmp.eq.s32.totalorder 0, 0
    // Predicated region
    $region46: #{tpu_custom_call.1} parent=1 // pred_check
      %p81 = pneg %p80
    $region47: #{tpu_custom_call.1} parent=1 // pred_check_branch
      %83 = sbr.rel (%p81) target = $region49
    $region48: #{tpu_custom_call.1} parent=1 // pred_region
      %v84 = vld [vmem:[#allocation6] sm:$0xff]
      %v85 = vld [vmem:[#allocation6 + $0x8] sm:$0xff]
      %v86 = vld [vmem:[#allocation6 + $0x10] sm:$0xff]
      %v87 = vld [vmem:[#allocation6 + $0x18] sm:$0xff]
      %v88 = vld [vmem:[#allocation6 + $0x20] sm:$0xff]
      %v89 = vld [vmem:[#allocation6 + $0x28] sm:$0xff]
      %v90 = vld [vmem:[#allocation6 + $0x30] sm:$0xff]
      %v91 = vld [vmem:[#allocation6 + $0x38] sm:$0xff]
      %92 = vst [vmem:[#allocation10] sm:$0xff] %v84
      %93 = vst [vmem:[#allocation10 + $0x8] sm:$0xff] %v85
      %94 = vst [vmem:[#allocation10 + $0x10] sm:$0xff] %v86
      %95 = vst [vmem:[#allocation10 + $0x18] sm:$0xff] %v87
      %96 = vst [vmem:[#allocation10 + $0x20] sm:$0xff] %v88
      %97 = vst [vmem:[#allocation10 + $0x28] sm:$0xff] %v89
      %98 = vst [vmem:[#allocation10 + $0x30] sm:$0xff] %v90
      %99 = vst [vmem:[#allocation10 + $0x38] sm:$0xff] %v91
    $region49: #{tpu_custom_call.1} parent=1 // pred_fallthru
      _
    %v100 = vld [vmem:[#allocation10] sm:$0xff]
    %v101 = vld [vmem:[#allocation10 + $0x8] sm:$0xff]
    %v102 = vld [vmem:[#allocation10 + $0x10] sm:$0xff]
    %v103 = vld [vmem:[#allocation10 + $0x18] sm:$0xff]
    %v104 = vld [vmem:[#allocation10 + $0x20] sm:$0xff]
    %v105 = vld [vmem:[#allocation10 + $0x28] sm:$0xff]
    %v106 = vld [vmem:[#allocation10 + $0x30] sm:$0xff]
    %v107 = vld [vmem:[#allocation10 + $0x38] sm:$0xff]
    %v108 = vpack.c.bf16 %v100, %v100
    %v109 = vpack.c.bf16 %v101, %v101
    %v110 = vpack.c.bf16 %v102, %v102
    %v111 = vpack.c.bf16 %v103, %v103
    %v112 = vpack.c.bf16 %v104, %v104
    %v113 = vpack.c.bf16 %v105, %v105
    %v114 = vpack.c.bf16 %v106, %v106
    %v115 = vpack.c.bf16 %v107, %v107
    %v116 = vld [vmem:[#allocation7] sm:$0xf]
    %v117 = vld [vmem:[#allocation7 + $0x4] sm:$0xf]
    %v118 = vld [vmem:[#allocation7 + $0x8] sm:$0xf]
    %v119 = vld [vmem:[#allocation7 + $0xc] sm:$0xf]
    %v120 = vld [vmem:[#allocation7 + $0x10] sm:$0xf]
    %v121 = vld [vmem:[#allocation7 + $0x14] sm:$0xf]
    %v122 = vld [vmem:[#allocation7 + $0x18] sm:$0xf]
    %v123 = vld [vmem:[#allocation7 + $0x1c] sm:$0xf]
    %v124 = vld [vmem:[#allocation7 + $0x20] sm:$0xf]
    %v125 = vld [vmem:[#allocation7 + $0x24] sm:$0xf]
    %v126 = vld [vmem:[#allocation7 + $0x28] sm:$0xf]
    %v127 = vld [vmem:[#allocation7 + $0x2c] sm:$0xf]
    %v128 = vld [vmem:[#allocation7 + $0x30] sm:$0xf]
    %v129 = vld [vmem:[#allocation7 + $0x34] sm:$0xf]
    %v130 = vld [vmem:[#allocation7 + $0x38] sm:$0xf]
    %v131 = vld [vmem:[#allocation7 + $0x3c] sm:$0xf]
    %v132 = vld [vmem:[#allocation7 + $0x40] sm:$0xf]
    %v133 = vld [vmem:[#allocation7 + $0x44] sm:$0xf]
    %v134 = vld [vmem:[#allocation7 + $0x48] sm:$0xf]
    %v135 = vld [vmem:[#allocation7 + $0x4c] sm:$0xf]
    %v136 = vld [vmem:[#allocation7 + $0x50] sm:$0xf]
    %v137 = vld [vmem:[#allocation7 + $0x54] sm:$0xf]
    %v138 = vld [vmem:[#allocation7 + $0x58] sm:$0xf]
    %v139 = vld [vmem:[#allocation7 + $0x5c] sm:$0xf]
    %v140 = vld [vmem:[#allocation7 + $0x60] sm:$0xf]
    %v141 = vld [vmem:[#allocation7 + $0x64] sm:$0xf]
    %v142 = vld [vmem:[#allocation7 + $0x68] sm:$0xf]
    %v143 = vld [vmem:[#allocation7 + $0x6c] sm:$0xf]
    %v144 = vld [vmem:[#allocation7 + $0x70] sm:$0xf]
    %v145 = vld [vmem:[#allocation7 + $0x74] sm:$0xf]
    %v146 = vld [vmem:[#allocation7 + $0x78] sm:$0xf]
    %v147 = vld [vmem:[#allocation7 + $0x7c] sm:$0xf]
    %v148 = vld [vmem:[#allocation7 + $0x80] sm:$0xf]
    %v149 = vld [vmem:[#allocation7 + $0x84] sm:$0xf]
    %v150 = vld [vmem:[#allocation7 + $0x88] sm:$0xf]
    %v151 = vld [vmem:[#allocation7 + $0x8c] sm:$0xf]
    %v152 = vld [vmem:[#allocation7 + $0x90] sm:$0xf]
    %v153 = vld [vmem:[#allocation7 + $0x94] sm:$0xf]
    %v154 = vld [vmem:[#allocation7 + $0x98] sm:$0xf]
    %v155 = vld [vmem:[#allocation7 + $0x9c] sm:$0xf]
    %v156 = vld [vmem:[#allocation7 + $0xa0] sm:$0xf]
    %v157 = vld [vmem:[#allocation7 + $0xa4] sm:$0xf]
    %v158 = vld [vmem:[#allocation7 + $0xa8] sm:$0xf]
    %v159 = vld [vmem:[#allocation7 + $0xac] sm:$0xf]
    %v160 = vld [vmem:[#allocation7 + $0xb0] sm:$0xf]
    %v161 = vld [vmem:[#allocation7 + $0xb4] sm:$0xf]
    %v162 = vld [vmem:[#allocation7 + $0xb8] sm:$0xf]
    %v163 = vld [vmem:[#allocation7 + $0xbc] sm:$0xf]
    %v164 = vld [vmem:[#allocation7 + $0xc0] sm:$0xf]
    %v165 = vld [vmem:[#allocation7 + $0xc4] sm:$0xf]
    %v166 = vld [vmem:[#allocation7 + $0xc8] sm:$0xf]
    %v167 = vld [vmem:[#allocation7 + $0xcc] sm:$0xf]
    %v168 = vld [vmem:[#allocation7 + $0xd0] sm:$0xf]
    %v169 = vld [vmem:[#allocation7 + $0xd4] sm:$0xf]
    %v170 = vld [vmem:[#allocation7 + $0xd8] sm:$0xf]
    %v171 = vld [vmem:[#allocation7 + $0xdc] sm:$0xf]
    %v172 = vld [vmem:[#allocation7 + $0xe0] sm:$0xf]
    %v173 = vld [vmem:[#allocation7 + $0xe4] sm:$0xf]
    %v174 = vld [vmem:[#allocation7 + $0xe8] sm:$0xf]
    %v175 = vld [vmem:[#allocation7 + $0xec] sm:$0xf]
    %v176 = vld [vmem:[#allocation7 + $0xf0] sm:$0xf]
    %v177 = vld [vmem:[#allocation7 + $0xf4] sm:$0xf]
    %v178 = vld [vmem:[#allocation7 + $0xf8] sm:$0xf]
    %v179 = vld [vmem:[#allocation7 + $0xfc] sm:$0xf]
    %v180 = vld [vmem:[#allocation7 + $0x100] sm:$0xf]
    %v181 = vld [vmem:[#allocation7 + $0x104] sm:$0xf]
    %v182 = vld [vmem:[#allocation7 + $0x108] sm:$0xf]
    %v183 = vld [vmem:[#allocation7 + $0x10c] sm:$0xf]
    %v184 = vld [vmem:[#allocation7 + $0x110] sm:$0xf]
    %v185 = vld [vmem:[#allocation7 + $0x114] sm:$0xf]
    %v186 = vld [vmem:[#allocation7 + $0x118] sm:$0xf]
    %v187 = vld [vmem:[#allocation7 + $0x11c] sm:$0xf]
    %v188 = vld [vmem:[#allocation7 + $0x120] sm:$0xf]
    %v189 = vld [vmem:[#allocation7 + $0x124] sm:$0xf]
    %v190 = vld [vmem:[#allocation7 + $0x128] sm:$0xf]
    %v191 = vld [vmem:[#allocation7 + $0x12c] sm:$0xf]
    %v192 = vld [vmem:[#allocation7 + $0x130] sm:$0xf]
    %v193 = vld [vmem:[#allocation7 + $0x134] sm:$0xf]
    %v194 = vld [vmem:[#allocation7 + $0x138] sm:$0xf]
    %v195 = vld [vmem:[#allocation7 + $0x13c] sm:$0xf]
    %v196 = vld [vmem:[#allocation7 + $0x140] sm:$0xf]
    %v197 = vld [vmem:[#allocation7 + $0x144] sm:$0xf]
    %v198 = vld [vmem:[#allocation7 + $0x148] sm:$0xf]
    %v199 = vld [vmem:[#allocation7 + $0x14c] sm:$0xf]
    %v200 = vld [vmem:[#allocation7 + $0x150] sm:$0xf]
    %v201 = vld [vmem:[#allocation7 + $0x154] sm:$0xf]
    %v202 = vld [vmem:[#allocation7 + $0x158] sm:$0xf]
    %v203 = vld [vmem:[#allocation7 + $0x15c] sm:$0xf]
    %v204 = vld [vmem:[#allocation7 + $0x160] sm:$0xf]
    %v205 = vld [vmem:[#allocation7 + $0x164] sm:$0xf]
    %v206 = vld [vmem:[#allocation7 + $0x168] sm:$0xf]
    %v207 = vld [vmem:[#allocation7 + $0x16c] sm:$0xf]
    %v208 = vld [vmem:[#allocation7 + $0x170] sm:$0xf]
    %v209 = vld [vmem:[#allocation7 + $0x174] sm:$0xf]
    %v210 = vld [vmem:[#allocation7 + $0x178] sm:$0xf]
    %v211 = vld [vmem:[#allocation7 + $0x17c] sm:$0xf]
    %v212 = vld [vmem:[#allocation7 + $0x180] sm:$0xf]
    %v213 = vld [vmem:[#allocation7 + $0x184] sm:$0xf]
    %v214 = vld [vmem:[#allocation7 + $0x188] sm:$0xf]
    %v215 = vld [vmem:[#allocation7 + $0x18c] sm:$0xf]
    %v216 = vld [vmem:[#allocation7 + $0x190] sm:$0xf]
    %v217 = vld [vmem:[#allocation7 + $0x194] sm:$0xf]
    %v218 = vld [vmem:[#allocation7 + $0x198] sm:$0xf]
    %v219 = vld [vmem:[#allocation7 + $0x19c] sm:$0xf]
    %v220 = vld [vmem:[#allocation7 + $0x1a0] sm:$0xf]
    %v221 = vld [vmem:[#allocation7 + $0x1a4] sm:$0xf]
    %v222 = vld [vmem:[#allocation7 + $0x1a8] sm:$0xf]
    %v223 = vld [vmem:[#allocation7 + $0x1ac] sm:$0xf]
    %v224 = vld [vmem:[#allocation7 + $0x1b0] sm:$0xf]
    %v225 = vld [vmem:[#allocation7 + $0x1b4] sm:$0xf]
    %v226 = vld [vmem:[#allocation7 + $0x1b8] sm:$0xf]
    %v227 = vld [vmem:[#allocation7 + $0x1bc] sm:$0xf]
    %v228 = vld [vmem:[#allocation7 + $0x1c0] sm:$0xf]
    %v229 = vld [vmem:[#allocation7 + $0x1c4] sm:$0xf]
    %v230 = vld [vmem:[#allocation7 + $0x1c8] sm:$0xf]
    %v231 = vld [vmem:[#allocation7 + $0x1cc] sm:$0xf]
    %v232 = vld [vmem:[#allocation7 + $0x1d0] sm:$0xf]
    %v233 = vld [vmem:[#allocation7 + $0x1d4] sm:$0xf]
    %v234 = vld [vmem:[#allocation7 + $0x1d8] sm:$0xf]
    %v235 = vld [vmem:[#allocation7 + $0x1dc] sm:$0xf]
    %v236 = vld [vmem:[#allocation7 + $0x1e0] sm:$0xf]
    %v237 = vld [vmem:[#allocation7 + $0x1e4] sm:$0xf]
    %v238 = vld [vmem:[#allocation7 + $0x1e8] sm:$0xf]
    %v239 = vld [vmem:[#allocation7 + $0x1ec] sm:$0xf]
    %v240 = vld [vmem:[#allocation7 + $0x1f0] sm:$0xf]
    %v241 = vld [vmem:[#allocation7 + $0x1f4] sm:$0xf]
    %v242 = vld [vmem:[#allocation7 + $0x1f8] sm:$0xf]
    %v243 = vld [vmem:[#allocation7 + $0x1fc] sm:$0xf]
    %v244 = vld [vmem:[%s4] sm:$0x1]
    %v246 = vlaneseq
    %v247 = vshrl.u32 %v246, 7
    %v248 = vsub.s32 0, %v247
    %v249 = vrot.slane %v244, %v248
    %v379 = vunpack.c.l.b16 %v116
    %v380 = vunpack.c.l.b16 %v117
    %v381 = vunpack.c.l.b16 %v118
    %v382 = vunpack.c.l.b16 %v119
    %v383 = vunpack.c.l.b16 %v120
    %v384 = vunpack.c.l.b16 %v121
    %v385 = vunpack.c.l.b16 %v122
    %v386 = vunpack.c.l.b16 %v123
    %v387 = vunpack.c.l.b16 %v124
    %v388 = vunpack.c.l.b16 %v125
    %v389 = vunpack.c.l.b16 %v126
    %v390 = vunpack.c.l.b16 %v127
    %v391 = vunpack.c.l.b16 %v128
    %v392 = vunpack.c.l.b16 %v129
    %v393 = vunpack.c.l.b16 %v130
    %v394 = vunpack.c.l.b16 %v131
    %v395 = vunpack.c.l.b16 %v132
    %v396 = vunpack.c.l.b16 %v133
    %v397 = vunpack.c.l.b16 %v134
    %v398 = vunpack.c.l.b16 %v135
    %v399 = vunpack.c.l.b16 %v136
    %v400 = vunpack.c.l.b16 %v137
    %v401 = vunpack.c.l.b16 %v138
    %v402 = vunpack.c.l.b16 %v139
    %v403 = vunpack.c.l.b16 %v140
    %v404 = vunpack.c.l.b16 %v141
    %v405 = vunpack.c.l.b16 %v142
    %v406 = vunpack.c.l.b16 %v143
    %v407 = vunpack.c.l.b16 %v144
    %v408 = vunpack.c.l.b16 %v145
    %v409 = vunpack.c.l.b16 %v146
    %v410 = vunpack.c.l.b16 %v147
    %v411 = vunpack.c.l.b16 %v148
    %v412 = vunpack.c.l.b16 %v149
    %v413 = vunpack.c.l.b16 %v150
    %v414 = vunpack.c.l.b16 %v151
    %v415 = vunpack.c.l.b16 %v152
    %v416 = vunpack.c.l.b16 %v153
    %v417 = vunpack.c.l.b16 %v154
    %v418 = vunpack.c.l.b16 %v155
    %v419 = vunpack.c.l.b16 %v156
    %v420 = vunpack.c.l.b16 %v157
    %v421 = vunpack.c.l.b16 %v158
    %v422 = vunpack.c.l.b16 %v159
    %v423 = vunpack.c.l.b16 %v160
    %v424 = vunpack.c.l.b16 %v161
    %v425 = vunpack.c.l.b16 %v162
    %v426 = vunpack.c.l.b16 %v163
    %v427 = vunpack.c.l.b16 %v164
    %v428 = vunpack.c.l.b16 %v165
    %v429 = vunpack.c.l.b16 %v166
    %v430 = vunpack.c.l.b16 %v167
    %v431 = vunpack.c.l.b16 %v168
    %v432 = vunpack.c.l.b16 %v169
    %v433 = vunpack.c.l.b16 %v170
    %v434 = vunpack.c.l.b16 %v171
    %v435 = vunpack.c.l.b16 %v172
    %v436 = vunpack.c.l.b16 %v173
    %v437 = vunpack.c.l.b16 %v174
    %v438 = vunpack.c.l.b16 %v175
    %v439 = vunpack.c.l.b16 %v176
    %v440 = vunpack.c.l.b16 %v177
    %v441 = vunpack.c.l.b16 %v178
    %v442 = vunpack.c.l.b16 %v179
    %v443 = vunpack.c.l.b16 %v180
    %v444 = vunpack.c.l.b16 %v181
    %v445 = vunpack.c.l.b16 %v182
    %v446 = vunpack.c.l.b16 %v183
    %v447 = vunpack.c.l.b16 %v184
    %v448 = vunpack.c.l.b16 %v185
    %v449 = vunpack.c.l.b16 %v186
    %v450 = vunpack.c.l.b16 %v187
    %v451 = vunpack.c.l.b16 %v188
    %v452 = vunpack.c.l.b16 %v189
    %v453 = vunpack.c.l.b16 %v190
    %v454 = vunpack.c.l.b16 %v191
    %v455 = vunpack.c.l.b16 %v192
    %v456 = vunpack.c.l.b16 %v193
    %v457 = vunpack.c.l.b16 %v194
    %v458 = vunpack.c.l.b16 %v195
    %v459 = vunpack.c.l.b16 %v196
    %v460 = vunpack.c.l.b16 %v197
    %v461 = vunpack.c.l.b16 %v198
    %v462 = vunpack.c.l.b16 %v199
    %v463 = vunpack.c.l.b16 %v200
    %v464 = vunpack.c.l.b16 %v201
    %v465 = vunpack.c.l.b16 %v202
    %v466 = vunpack.c.l.b16 %v203
    %v467 = vunpack.c.l.b16 %v204
    %v468 = vunpack.c.l.b16 %v205
    %v469 = vunpack.c.l.b16 %v206
    %v470 = vunpack.c.l.b16 %v207
    %v471 = vunpack.c.l.b16 %v208
    %v472 = vunpack.c.l.b16 %v209
    %v473 = vunpack.c.l.b16 %v210
    %v474 = vunpack.c.l.b16 %v211
    %v475 = vunpack.c.l.b16 %v212
    %v476 = vunpack.c.l.b16 %v213
    %v477 = vunpack.c.l.b16 %v214
    %v478 = vunpack.c.l.b16 %v215
    %v479 = vunpack.c.l.b16 %v216
    %v480 = vunpack.c.l.b16 %v217
    %v481 = vunpack.c.l.b16 %v218
    %v482 = vunpack.c.l.b16 %v219
    %v483 = vunpack.c.l.b16 %v220
    %v484 = vunpack.c.l.b16 %v221
    %v485 = vunpack.c.l.b16 %v222
    %v486 = vunpack.c.l.b16 %v223
    %v487 = vunpack.c.l.b16 %v224
    %v488 = vunpack.c.l.b16 %v225
    %v489 = vunpack.c.l.b16 %v226
    %v490 = vunpack.c.l.b16 %v227
    %v491 = vunpack.c.l.b16 %v228
    %v492 = vunpack.c.l.b16 %v229
    %v493 = vunpack.c.l.b16 %v230
    %v494 = vunpack.c.l.b16 %v231
    %v495 = vunpack.c.l.b16 %v232
    %v496 = vunpack.c.l.b16 %v233
    %v497 = vunpack.c.l.b16 %v234
    %v498 = vunpack.c.l.b16 %v235
    %v499 = vunpack.c.l.b16 %v236
    %v500 = vunpack.c.l.b16 %v237
    %v501 = vunpack.c.l.b16 %v238
    %v502 = vunpack.c.l.b16 %v239
    %v503 = vunpack.c.l.b16 %v240
    %v504 = vunpack.c.l.b16 %v241
    %v505 = vunpack.c.l.b16 %v242
    %v506 = vunpack.c.l.b16 %v243
    %v507 = vpack.c.b16 %v380, %v379
    %v508 = vpack.c.b16 %v382, %v381
    %v509 = vpack.c.b16 %v384, %v383
    %v510 = vpack.c.b16 %v386, %v385
    %v511 = vpack.c.b16 %v388, %v387
    %v512 = vpack.c.b16 %v390, %v389
    %v513 = vpack.c.b16 %v392, %v391
    %v514 = vpack.c.b16 %v394, %v393
    %v515 = vpack.c.b16 %v396, %v395
    %v516 = vpack.c.b16 %v398, %v397
    %v517 = vpack.c.b16 %v400, %v399
    %v518 = vpack.c.b16 %v402, %v401
    %v519 = vpack.c.b16 %v404, %v403
    %v520 = vpack.c.b16 %v406, %v405
    %v521 = vpack.c.b16 %v408, %v407
    %v522 = vpack.c.b16 %v410, %v409
    %v523 = vpack.c.b16 %v412, %v411
    %v524 = vpack.c.b16 %v414, %v413
    %v525 = vpack.c.b16 %v416, %v415
    %v526 = vpack.c.b16 %v418, %v417
    %v527 = vpack.c.b16 %v420, %v419
    %v528 = vpack.c.b16 %v422, %v421
    %v529 = vpack.c.b16 %v424, %v423
    %v530 = vpack.c.b16 %v426, %v425
    %v531 = vpack.c.b16 %v428, %v427
    %v532 = vpack.c.b16 %v430, %v429
    %v533 = vpack.c.b16 %v432, %v431
    %v534 = vpack.c.b16 %v434, %v433
    %v535 = vpack.c.b16 %v436, %v435
    %v536 = vpack.c.b16 %v438, %v437
    %v537 = vpack.c.b16 %v440, %v439
    %v538 = vpack.c.b16 %v442, %v441
    %v539 = vpack.c.b16 %v444, %v443
    %v540 = vpack.c.b16 %v446, %v445
    %v541 = vpack.c.b16 %v448, %v447
    %v542 = vpack.c.b16 %v450, %v449
    %v543 = vpack.c.b16 %v452, %v451
    %v544 = vpack.c.b16 %v454, %v453
    %v545 = vpack.c.b16 %v456, %v455
    %v546 = vpack.c.b16 %v458, %v457
    %v547 = vpack.c.b16 %v460, %v459
    %v548 = vpack.c.b16 %v462, %v461
    %v549 = vpack.c.b16 %v464, %v463
    %v550 = vpack.c.b16 %v466, %v465
    %v551 = vpack.c.b16 %v468, %v467
    %v552 = vpack.c.b16 %v470, %v469
    %v553 = vpack.c.b16 %v472, %v471
    %v554 = vpack.c.b16 %v474, %v473
    %v555 = vpack.c.b16 %v476, %v475
    %v556 = vpack.c.b16 %v478, %v477
    %v557 = vpack.c.b16 %v480, %v479
    %v558 = vpack.c.b16 %v482, %v481
    %v559 = vpack.c.b16 %v484, %v483
    %v560 = vpack.c.b16 %v486, %v485
    %v561 = vpack.c.b16 %v488, %v487
    %v562 = vpack.c.b16 %v490, %v489
    %v563 = vpack.c.b16 %v492, %v491
    %v564 = vpack.c.b16 %v494, %v493
    %v565 = vpack.c.b16 %v496, %v495
    %v566 = vpack.c.b16 %v498, %v497
    %v567 = vpack.c.b16 %v500, %v499
    %v568 = vpack.c.b16 %v502, %v501
    %v569 = vpack.c.b16 %v504, %v503
    %v570 = vpack.c.b16 %v506, %v505
    %635 = vmatprep.subr.bf16.mxu0 0
    %636 = vmatpush1.bf16.msra.mxu0 %v507
    %637 = vmatprep.subr.bf16.mxu0 0
    %638 = vmatpush1.bf16.msra.mxu0 %v508
    %639 = vmatprep.subr.bf16.mxu0 0
    %640 = vmatpush1.bf16.msra.mxu0 %v509
    %641 = vmatprep.subr.bf16.mxu0 0
    %642 = vmatpush1.bf16.msra.mxu0 %v510
    %643 = vmatprep.subr.bf16.mxu0 0
    %644 = vmatpush1.bf16.msra.mxu0 %v511
    %645 = vmatprep.subr.bf16.mxu0 0
    %646 = vmatpush1.bf16.msra.mxu0 %v512
    %647 = vmatprep.subr.bf16.mxu0 0
    %648 = vmatpush1.bf16.msra.mxu0 %v513
    %649 = vmatprep.subr.bf16.mxu0 0
    %650 = vmatpush1.bf16.msra.mxu0 %v514
    %651 = vmatprep.subr.bf16.mxu0 0
    %652 = vmatpush1.bf16.msra.mxu0 %v515
    %653 = vmatprep.subr.bf16.mxu0 0
    %654 = vmatpush1.bf16.msra.mxu0 %v516
    %655 = vmatprep.subr.bf16.mxu0 0
    %656 = vmatpush1.bf16.msra.mxu0 %v517
    %657 = vmatprep.subr.bf16.mxu0 0
    %658 = vmatpush1.bf16.msra.mxu0 %v518
    %659 = vmatprep.subr.bf16.mxu0 0
    %660 = vmatpush1.bf16.msra.mxu0 %v519
    %661 = vmatprep.subr.bf16.mxu0 0
    %662 = vmatpush1.bf16.msra.mxu0 %v520
    %663 = vmatprep.subr.bf16.mxu0 0
    %664 = vmatpush1.bf16.msra.mxu0 %v521
    %665 = vmatprep.subr.bf16.mxu0 0
    %666 = vmatpush1.bf16.msra.mxu0 %v522
    %667 = vmatprep.mubr.bf16.mxu0 %v109
    %668 = vmatmul.mubr.bf16.gmra.mrb[0].mxu0 %v108
    %v669 = vpop.f32.mrb[0].mxu0
    %v670 = vadd.f32 %v249, %v669
    %v671 = vpop.f32.mrb[0].mxu0
    %v672 = vpop.f32.mrb[0].mxu0
    %v673 = vpop.f32.mrb[0].mxu0
    %674 = vdwg.mxu0
    %675 = vmatprep.subr.bf16.mxu0 0
    %676 = vmatpush1.bf16.msra.mxu0 %v523
    %677 = vmatprep.subr.bf16.mxu0 0
    %678 = vmatpush1.bf16.msra.mxu0 %v524
    %679 = vmatprep.subr.bf16.mxu0 0
    %680 = vmatpush1.bf16.msra.mxu0 %v525
    %681 = vmatprep.subr.bf16.mxu0 0
    %682 = vmatpush1.bf16.msra.mxu0 %v526
    %683 = vmatprep.subr.bf16.mxu0 0
    %684 = vmatpush1.bf16.msra.mxu0 %v527
    %685 = vmatprep.subr.bf16.mxu0 0
    %686 = vmatpush1.bf16.msra.mxu0 %v528
    %687 = vmatprep.subr.bf16.mxu0 0
    %688 = vmatpush1.bf16.msra.mxu0 %v529
    %689 = vmatprep.subr.bf16.mxu0 0
    %690 = vmatpush1.bf16.msra.mxu0 %v530
    %691 = vmatprep.subr.bf16.mxu0 0
    %692 = vmatpush1.bf16.msra.mxu0 %v531
    %693 = vmatprep.subr.bf16.mxu0 0
    %694 = vmatpush1.bf16.msra.mxu0 %v532
    %695 = vmatprep.subr.bf16.mxu0 0
    %696 = vmatpush1.bf16.msra.mxu0 %v533
    %697 = vmatprep.subr.bf16.mxu0 0
    %698 = vmatpush1.bf16.msra.mxu0 %v534
    %699 = vmatprep.subr.bf16.mxu0 0
    %700 = vmatpush1.bf16.msra.mxu0 %v535
    %701 = vmatprep.subr.bf16.mxu0 0
    %702 = vmatpush1.bf16.msra.mxu0 %v536
    %703 = vmatprep.subr.bf16.mxu0 0
    %704 = vmatpush1.bf16.msra.mxu0 %v537
    %705 = vmatprep.subr.bf16.mxu0 0
    %706 = vmatpush1.bf16.msra.mxu0 %v538
    %707 = vmatprep.mubr.bf16.mxu0 %v111
    %708 = vmatmul.mubr.bf16.gmra.mrb[0].mxu0 %v110
    %v709 = vpop.f32.mrb[0].mxu0
    %v710 = vadd.f32 %v670, %v709
    %v711 = vpop.f32.mrb[0].mxu0
    %v712 = vpop.f32.mrb[0].mxu0
    %v713 = vpop.f32.mrb[0].mxu0
    %714 = vdwg.mxu0
    %715 = vmatprep.subr.bf16.mxu0 0
    %716 = vmatpush1.bf16.msra.mxu0 %v539
    %717 = vmatprep.subr.bf16.mxu0 0
    %718 = vmatpush1.bf16.msra.mxu0 %v540
    %719 = vmatprep.subr.bf16.mxu0 0
    %720 = vmatpush1.bf16.msra.mxu0 %v541
    %721 = vmatprep.subr.bf16.mxu0 0
    %722 = vmatpush1.bf16.msra.mxu0 %v542
    %723 = vmatprep.subr.bf16.mxu0 0
    %724 = vmatpush1.bf16.msra.mxu0 %v543
    %725 = vmatprep.subr.bf16.mxu0 0
    %726 = vmatpush1.bf16.msra.mxu0 %v544
    %727 = vmatprep.subr.bf16.mxu0 0
    %728 = vmatpush1.bf16.msra.mxu0 %v545
    %729 = vmatprep.subr.bf16.mxu0 0
    %730 = vmatpush1.bf16.msra.mxu0 %v546
    %731 = vmatprep.subr.bf16.mxu0 0
    %732 = vmatpush1.bf16.msra.mxu0 %v547
    %733 = vmatprep.subr.bf16.mxu0 0
    %734 = vmatpush1.bf16.msra.mxu0 %v548
    %735 = vmatprep.subr.bf16.mxu0 0
    %736 = vmatpush1.bf16.msra.mxu0 %v549
    %737 = vmatprep.subr.bf16.mxu0 0
    %738 = vmatpush1.bf16.msra.mxu0 %v550
    %739 = vmatprep.subr.bf16.mxu0 0
    %740 = vmatpush1.bf16.msra.mxu0 %v551
    %741 = vmatprep.subr.bf16.mxu0 0
    %742 = vmatpush1.bf16.msra.mxu0 %v552
    %743 = vmatprep.subr.bf16.mxu0 0
    %744 = vmatpush1.bf16.msra.mxu0 %v553
    %745 = vmatprep.subr.bf16.mxu0 0
    %746 = vmatpush1.bf16.msra.mxu0 %v554
    %747 = vmatprep.mubr.bf16.mxu0 %v113
    %748 = vmatmul.mubr.bf16.gmra.mrb[0].mxu0 %v112
    %v749 = vpop.f32.mrb[0].mxu0
    %v750 = vadd.f32 %v710, %v749
    %v751 = vpop.f32.mrb[0].mxu0
    %v752 = vpop.f32.mrb[0].mxu0
    %v753 = vpop.f32.mrb[0].mxu0
    %754 = vdwg.mxu0
    %755 = vmatprep.subr.bf16.mxu0 0
    %756 = vmatpush1.bf16.msra.mxu0 %v555
    %757 = vmatprep.subr.bf16.mxu0 0
    %758 = vmatpush1.bf16.msra.mxu0 %v556
    %759 = vmatprep.subr.bf16.mxu0 0
    %760 = vmatpush1.bf16.msra.mxu0 %v557
    %761 = vmatprep.subr.bf16.mxu0 0
    %762 = vmatpush1.bf16.msra.mxu0 %v558
    %763 = vmatprep.subr.bf16.mxu0 0
    %764 = vmatpush1.bf16.msra.mxu0 %v559
    %765 = vmatprep.subr.bf16.mxu0 0
    %766 = vmatpush1.bf16.msra.mxu0 %v560
    %767 = vmatprep.subr.bf16.mxu0 0
    %768 = vmatpush1.bf16.msra.mxu0 %v561
    %769 = vmatprep.subr.bf16.mxu0 0
    %770 = vmatpush1.bf16.msra.mxu0 %v562
    %771 = vmatprep.subr.bf16.mxu0 0
    %772 = vmatpush1.bf16.msra.mxu0 %v563
    %773 = vmatprep.subr.bf16.mxu0 0
    %774 = vmatpush1.bf16.msra.mxu0 %v564
    %775 = vmatprep.subr.bf16.mxu0 0
    %776 = vmatpush1.bf16.msra.mxu0 %v565
    %777 = vmatprep.subr.bf16.mxu0 0
    %778 = vmatpush1.bf16.msra.mxu0 %v566
    %779 = vmatprep.subr.bf16.mxu0 0
    %780 = vmatpush1.bf16.msra.mxu0 %v567
    %781 = vmatprep.subr.bf16.mxu0 0
    %782 = vmatpush1.bf16.msra.mxu0 %v568
    %783 = vmatprep.subr.bf16.mxu0 0
    %784 = vmatpush1.bf16.msra.mxu0 %v569
    %785 = vmatprep.subr.bf16.mxu0 0
    %786 = vmatpush1.bf16.msra.mxu0 %v570
    %787 = vmatprep.mubr.bf16.mxu0 %v115
    %788 = vmatmul.mubr.bf16.gmra.mrb[0].mxu0 %v114
    %v789 = vpop.f32.mrb[0].mxu0
    %v790 = vadd.f32 %v750, %v789
    %v791 = vpop.f32.mrb[0].mxu0
    %v792 = vpop.f32.mrb[0].mxu0
    %v793 = vpop.f32.mrb[0].mxu0
    %794 = vdwg.mxu0
    %v795 = vmul.f32 %v790, %v790
    %v796 = vmul.f32 %v790, %v795
    %v797 = vmul.f32 %v796, 0.044715
    %v798 = vadd.f32 %v790, %v797
    %v799 = vmul.f32 %v798, 0.7978846
    %v800 = vtanh.pop %v799
    %v801 = vadd.f32 %v800, 1.0
    %v802 = vmul.f32 %v801, 0.5
    %v803 = vmul.f32 %v790, %v802
    %v804 = vpack.c.bf16 %v803, %v803
    %v805 = vld [vmem:[#allocation9] sm:$0xff]
    %v806 = vld [vmem:[#allocation9 + $0x8] sm:$0xff]
    %v807 = vld [vmem:[#allocation9 + $0x10] sm:$0xff]
    %v808 = vld [vmem:[#allocation9 + $0x18] sm:$0xff]
    %v809 = vld [vmem:[#allocation9 + $0x20] sm:$0xff]
    %v810 = vld [vmem:[#allocation9 + $0x28] sm:$0xff]
    %v811 = vld [vmem:[#allocation9 + $0x30] sm:$0xff]
    %v812 = vld [vmem:[#allocation9 + $0x38] sm:$0xff]
    %v813 = vld [vmem:[#allocation9 + $0x40] sm:$0xff]
    %v814 = vld [vmem:[#allocation9 + $0x48] sm:$0xff]
    %v815 = vld [vmem:[#allocation9 + $0x50] sm:$0xff]
    %v816 = vld [vmem:[#allocation9 + $0x58] sm:$0xff]
    %v817 = vld [vmem:[#allocation9 + $0x60] sm:$0xff]
    %v818 = vld [vmem:[#allocation9 + $0x68] sm:$0xff]
    %v819 = vld [vmem:[#allocation9 + $0x70] sm:$0xff]
    %v820 = vld [vmem:[#allocation9 + $0x78] sm:$0xff]
    %v821 = vld [vmem:[#allocation9 + $0x80] sm:$0xff]
    %v822 = vld [vmem:[#allocation9 + $0x88] sm:$0xff]
    %v823 = vld [vmem:[#allocation9 + $0x90] sm:$0xff]
    %v824 = vld [vmem:[#allocation9 + $0x98] sm:$0xff]
    %v825 = vld [vmem:[#allocation9 + $0xa0] sm:$0xff]
    %v826 = vld [vmem:[#allocation9 + $0xa8] sm:$0xff]
    %v827 = vld [vmem:[#allocation9 + $0xb0] sm:$0xff]
    %v828 = vld [vmem:[#allocation9 + $0xb8] sm:$0xff]
    %v829 = vld [vmem:[#allocation9 + $0xc0] sm:$0xff]
    %v830 = vld [vmem:[#allocation9 + $0xc8] sm:$0xff]
    %v831 = vld [vmem:[#allocation9 + $0xd0] sm:$0xff]
    %v832 = vld [vmem:[#allocation9 + $0xd8] sm:$0xff]
    %v833 = vld [vmem:[#allocation9 + $0xe0] sm:$0xff]
    %v834 = vld [vmem:[#allocation9 + $0xe8] sm:$0xff]
    %v835 = vld [vmem:[#allocation9 + $0xf0] sm:$0xff]
    %v836 = vld [vmem:[#allocation9 + $0xf8] sm:$0xff]
    %v837 = vld [vmem:[#allocation9 + $0x100] sm:$0xff]
    %v838 = vld [vmem:[#allocation9 + $0x108] sm:$0xff]
    %v839 = vld [vmem:[#allocation9 + $0x110] sm:$0xff]
    %v840 = vld [vmem:[#allocation9 + $0x118] sm:$0xff]
    %v841 = vld [vmem:[#allocation9 + $0x120] sm:$0xff]
    %v842 = vld [vmem:[#allocation9 + $0x128] sm:$0xff]
    %v843 = vld [vmem:[#allocation9 + $0x130] sm:$0xff]
    %v844 = vld [vmem:[#allocation9 + $0x138] sm:$0xff]
    %v845 = vld [vmem:[#allocation9 + $0x140] sm:$0xff]
    %v846 = vld [vmem:[#allocation9 + $0x148] sm:$0xff]
    %v847 = vld [vmem:[#allocation9 + $0x150] sm:$0xff]
    %v848 = vld [vmem:[#allocation9 + $0x158] sm:$0xff]
    %v849 = vld [vmem:[#allocation9 + $0x160] sm:$0xff]
    %v850 = vld [vmem:[#allocation9 + $0x168] sm:$0xff]
    %v851 = vld [vmem:[#allocation9 + $0x170] sm:$0xff]
    %v852 = vld [vmem:[#allocation9 + $0x178] sm:$0xff]
    %v853 = vld [vmem:[#allocation9 + $0x180] sm:$0xff]
    %v854 = vld [vmem:[#allocation9 + $0x188] sm:$0xff]
    %v855 = vld [vmem:[#allocation9 + $0x190] sm:$0xff]
    %v856 = vld [vmem:[#allocation9 + $0x198] sm:$0xff]
    %v857 = vld [vmem:[#allocation9 + $0x1a0] sm:$0xff]
    %v858 = vld [vmem:[#allocation9 + $0x1a8] sm:$0xff]
    %v859 = vld [vmem:[#allocation9 + $0x1b0] sm:$0xff]
    %v860 = vld [vmem:[#allocation9 + $0x1b8] sm:$0xff]
    %v861 = vld [vmem:[#allocation9 + $0x1c0] sm:$0xff]
    %v862 = vld [vmem:[#allocation9 + $0x1c8] sm:$0xff]
    %v863 = vld [vmem:[#allocation9 + $0x1d0] sm:$0xff]
    %v864 = vld [vmem:[#allocation9 + $0x1d8] sm:$0xff]
    %v865 = vld [vmem:[#allocation9 + $0x1e0] sm:$0xff]
    %v866 = vld [vmem:[#allocation9 + $0x1e8] sm:$0xff]
    %v867 = vld [vmem:[#allocation9 + $0x1f0] sm:$0xff]
    %v868 = vld [vmem:[#allocation9 + $0x1f8] sm:$0xff]
    %v869 = vld [vmem:[%s6] sm:$0xff]
    %v871 = vlaneseq
    %v872 = vshrl.u32 %v871, 7
    %v873 = vsub.s32 0, %v872
    %v874 = vrot.slane %v869, %v873
    %v875 = vlaneseq
    %v876 = vshrl.u32 %v875, 7
    %v877 = vsub.s32 1, %v876
    %v878 = vrot.slane %v869, %v877
    %v879 = vlaneseq
    %v880 = vshrl.u32 %v879, 7
    %v881 = vsub.s32 2, %v880
    %v882 = vrot.slane %v869, %v881
    %v883 = vlaneseq
    %v884 = vshrl.u32 %v883, 7
    %v885 = vsub.s32 3, %v884
    %v886 = vrot.slane %v869, %v885
    %v887 = vlaneseq
    %v888 = vshrl.u32 %v887, 7
    %v889 = vsub.s32 4, %v888
    %v890 = vrot.slane %v869, %v889
    %v891 = vlaneseq
    %v892 = vshrl.u32 %v891, 7
    %v893 = vsub.s32 5, %v892
    %v894 = vrot.slane %v869, %v893
    %v895 = vlaneseq
    %v896 = vshrl.u32 %v895, 7
    %v897 = vsub.s32 6, %v896
    %v898 = vrot.slane %v869, %v897
    %v899 = vlaneseq
    %v900 = vshrl.u32 %v899, 7
    %v901 = vsub.s32 7, %v900
    %v902 = vrot.slane %v869, %v901
    %v975 = vunpack.c.l.b16 %v805
    %v976 = vunpack.c.h.b16 %v805
    %v977 = vunpack.c.l.b16 %v806
    %v978 = vunpack.c.h.b16 %v806
    %v979 = vunpack.c.l.b16 %v807
    %v980 = vunpack.c.h.b16 %v807
    %v981 = vunpack.c.l.b16 %v808
    %v982 = vunpack.c.h.b16 %v808
    %v983 = vunpack.c.l.b16 %v809
    %v984 = vunpack.c.h.b16 %v809
    %v985 = vunpack.c.l.b16 %v810
    %v986 = vunpack.c.h.b16 %v810
    %v987 = vunpack.c.l.b16 %v811
    %v988 = vunpack.c.h.b16 %v811
    %v989 = vunpack.c.l.b16 %v812
    %v990 = vunpack.c.h.b16 %v812
    %v991 = vunpack.c.l.b16 %v813
    %v992 = vunpack.c.h.b16 %v813
    %v993 = vunpack.c.l.b16 %v814
    %v994 = vunpack.c.h.b16 %v814
    %v995 = vunpack.c.l.b16 %v815
    %v996 = vunpack.c.h.b16 %v815
    %v997 = vunpack.c.l.b16 %v816
    %v998 = vunpack.c.h.b16 %v816
    %v999 = vunpack.c.l.b16 %v817
    %v1000 = vunpack.c.h.b16 %v817
    %v1001 = vunpack.c.l.b16 %v818
    %v1002 = vunpack.c.h.b16 %v818
    %v1003 = vunpack.c.l.b16 %v819
    %v1004 = vunpack.c.h.b16 %v819
    %v1005 = vunpack.c.l.b16 %v820
    %v1006 = vunpack.c.h.b16 %v820
    %v1007 = vunpack.c.l.b16 %v821
    %v1008 = vunpack.c.h.b16 %v821
    %v1009 = vunpack.c.l.b16 %v822
    %v1010 = vunpack.c.h.b16 %v822
    %v1011 = vunpack.c.l.b16 %v823
    %v1012 = vunpack.c.h.b16 %v823
    %v1013 = vunpack.c.l.b16 %v824
    %v1014 = vunpack.c.h.b16 %v824
    %v1015 = vunpack.c.l.b16 %v825
    %v1016 = vunpack.c.h.b16 %v825
    %v1017 = vunpack.c.l.b16 %v826
    %v1018 = vunpack.c.h.b16 %v826
    %v1019 = vunpack.c.l.b16 %v827
    %v1020 = vunpack.c.h.b16 %v827
    %v1021 = vunpack.c.l.b16 %v828
    %v1022 = vunpack.c.h.b16 %v828
    %v1023 = vunpack.c.l.b16 %v829
    %v1024 = vunpack.c.h.b16 %v829
    %v1025 = vunpack.c.l.b16 %v830
    %v1026 = vunpack.c.h.b16 %v830
    %v1027 = vunpack.c.l.b16 %v831
    %v1028 = vunpack.c.h.b16 %v831
    %v1029 = vunpack.c.l.b16 %v832
    %v1030 = vunpack.c.h.b16 %v832
    %v1031 = vunpack.c.l.b16 %v833
    %v1032 = vunpack.c.h.b16 %v833
    %v1033 = vunpack.c.l.b16 %v834
    %v1034 = vunpack.c.h.b16 %v834
    %v1035 = vunpack.c.l.b16 %v835
    %v1036 = vunpack.c.h.b16 %v835
    %v1037 = vunpack.c.l.b16 %v836
    %v1038 = vunpack.c.h.b16 %v836
    %v1039 = vunpack.c.l.b16 %v837
    %v1040 = vunpack.c.h.b16 %v837
    %v1041 = vunpack.c.l.b16 %v838
    %v1042 = vunpack.c.h.b16 %v838
    %v1043 = vunpack.c.l.b16 %v839
    %v1044 = vunpack.c.h.b16 %v839
    %v1045 = vunpack.c.l.b16 %v840
    %v1046 = vunpack.c.h.b16 %v840
    %v1047 = vunpack.c.l.b16 %v841
    %v1048 = vunpack.c.h.b16 %v841
    %v1049 = vunpack.c.l.b16 %v842
    %v1050 = vunpack.c.h.b16 %v842
    %v1051 = vunpack.c.l.b16 %v843
    %v1052 = vunpack.c.h.b16 %v843
    %v1053 = vunpack.c.l.b16 %v844
    %v1054 = vunpack.c.h.b16 %v844
    %v1055 = vunpack.c.l.b16 %v845
    %v1056 = vunpack.c.h.b16 %v845
    %v1057 = vunpack.c.l.b16 %v846
    %v1058 = vunpack.c.h.b16 %v846
    %v1059 = vunpack.c.l.b16 %v847
    %v1060 = vunpack.c.h.b16 %v847
    %v1061 = vunpack.c.l.b16 %v848
    %v1062 = vunpack.c.h.b16 %v848
    %v1063 = vunpack.c.l.b16 %v849
    %v1064 = vunpack.c.h.b16 %v849
    %v1065 = vunpack.c.l.b16 %v850
    %v1066 = vunpack.c.h.b16 %v850
    %v1067 = vunpack.c.l.b16 %v851
    %v1068 = vunpack.c.h.b16 %v851
    %v1069 = vunpack.c.l.b16 %v852
    %v1070 = vunpack.c.h.b16 %v852
    %v1071 = vunpack.c.l.b16 %v853
    %v1072 = vunpack.c.h.b16 %v853
    %v1073 = vunpack.c.l.b16 %v854
    %v1074 = vunpack.c.h.b16 %v854
    %v1075 = vunpack.c.l.b16 %v855
    %v1076 = vunpack.c.h.b16 %v855
    %v1077 = vunpack.c.l.b16 %v856
    %v1078 = vunpack.c.h.b16 %v856
    %v1079 = vunpack.c.l.b16 %v857
    %v1080 = vunpack.c.h.b16 %v857
    %v1081 = vunpack.c.l.b16 %v858
    %v1082 = vunpack.c.h.b16 %v858
    %v1083 = vunpack.c.l.b16 %v859
    %v1084 = vunpack.c.h.b16 %v859
    %v1085 = vunpack.c.l.b16 %v860
    %v1086 = vunpack.c.h.b16 %v860
    %v1087 = vunpack.c.l.b16 %v861
    %v1088 = vunpack.c.h.b16 %v861
    %v1089 = vunpack.c.l.b16 %v862
    %v1090 = vunpack.c.h.b16 %v862
    %v1091 = vunpack.c.l.b16 %v863
    %v1092 = vunpack.c.h.b16 %v863
    %v1093 = vunpack.c.l.b16 %v864
    %v1094 = vunpack.c.h.b16 %v864
    %v1095 = vunpack.c.l.b16 %v865
    %v1096 = vunpack.c.h.b16 %v865
    %v1097 = vunpack.c.l.b16 %v866
    %v1098 = vunpack.c.h.b16 %v866
    %v1099 = vunpack.c.l.b16 %v867
    %v1100 = vunpack.c.h.b16 %v867
    %v1101 = vunpack.c.l.b16 %v868
    %v1102 = vunpack.c.h.b16 %v868
    %v1103 = vpack.c.b16 %v983, %v975
    %v1104 = vpack.c.b16 %v984, %v976
    %v1105 = vpack.c.b16 %v985, %v977
    %v1106 = vpack.c.b16 %v986, %v978
    %v1107 = vpack.c.b16 %v987, %v979
    %v1108 = vpack.c.b16 %v988, %v980
    %v1109 = vpack.c.b16 %v989, %v981
    %v1110 = vpack.c.b16 %v990, %v982
    %v1111 = vpack.c.b16 %v999, %v991
    %v1112 = vpack.c.b16 %v1000, %v992
    %v1113 = vpack.c.b16 %v1001, %v993
    %v1114 = vpack.c.b16 %v1002, %v994
    %v1115 = vpack.c.b16 %v1003, %v995
    %v1116 = vpack.c.b16 %v1004, %v996
    %v1117 = vpack.c.b16 %v1005, %v997
    %v1118 = vpack.c.b16 %v1006, %v998
    %v1119 = vpack.c.b16 %v1015, %v1007
    %v1120 = vpack.c.b16 %v1016, %v1008
    %v1121 = vpack.c.b16 %v1017, %v1009
    %v1122 = vpack.c.b16 %v1018, %v1010
    %v1123 = vpack.c.b16 %v1019, %v1011
    %v1124 = vpack.c.b16 %v1020, %v1012
    %v1125 = vpack.c.b16 %v1021, %v1013
    %v1126 = vpack.c.b16 %v1022, %v1014
    %v1127 = vpack.c.b16 %v1031, %v1023
    %v1128 = vpack.c.b16 %v1032, %v1024
    %v1129 = vpack.c.b16 %v1033, %v1025
    %v1130 = vpack.c.b16 %v1034, %v1026
    %v1131 = vpack.c.b16 %v1035, %v1027
    %v1132 = vpack.c.b16 %v1036, %v1028
    %v1133 = vpack.c.b16 %v1037, %v1029
    %v1134 = vpack.c.b16 %v1038, %v1030
    %v1135 = vpack.c.b16 %v1047, %v1039
    %v1136 = vpack.c.b16 %v1048, %v1040
    %v1137 = vpack.c.b16 %v1049, %v1041
    %v1138 = vpack.c.b16 %v1050, %v1042
    %v1139 = vpack.c.b16 %v1051, %v1043
    %v1140 = vpack.c.b16 %v1052, %v1044
    %v1141 = vpack.c.b16 %v1053, %v1045
    %v1142 = vpack.c.b16 %v1054, %v1046
    %v1143 = vpack.c.b16 %v1063, %v1055
    %v1144 = vpack.c.b16 %v1064, %v1056
    %v1145 = vpack.c.b16 %v1065, %v1057
    %v1146 = vpack.c.b16 %v1066, %v1058
    %v1147 = vpack.c.b16 %v1067, %v1059
    %v1148 = vpack.c.b16 %v1068, %v1060
    %v1149 = vpack.c.b16 %v1069, %v1061
    %v1150 = vpack.c.b16 %v1070, %v1062
    %v1151 = vpack.c.b16 %v1079, %v1071
    %v1152 = vpack.c.b16 %v1080, %v1072
    %v1153 = vpack.c.b16 %v1081, %v1073
    %v1154 = vpack.c.b16 %v1082, %v1074
    %v1155 = vpack.c.b16 %v1083, %v1075
    %v1156 = vpack.c.b16 %v1084, %v1076
    %v1157 = vpack.c.b16 %v1085, %v1077
    %v1158 = vpack.c.b16 %v1086, %v1078
    %v1159 = vpack.c.b16 %v1095, %v1087
    %v1160 = vpack.c.b16 %v1096, %v1088
    %v1161 = vpack.c.b16 %v1097, %v1089
    %v1162 = vpack.c.b16 %v1098, %v1090
    %v1163 = vpack.c.b16 %v1099, %v1091
    %v1164 = vpack.c.b16 %v1100, %v1092
    %v1165 = vpack.c.b16 %v1101, %v1093
    %v1166 = vpack.c.b16 %v1102, %v1094
    %1231 = vmatprep.subr.bf16.mxu0 %v1104
    %1232 = vmatpush1.bf16.msra.mxu0 %v1103
    %1233 = vmatprep.subr.bf16.mxu0 %v1112
    %1234 = vmatpush1.bf16.msra.mxu0 %v1111
    %1235 = vmatprep.subr.bf16.mxu0 %v1120
    %1236 = vmatpush1.bf16.msra.mxu0 %v1119
    %1237 = vmatprep.subr.bf16.mxu0 %v1128
    %1238 = vmatpush1.bf16.msra.mxu0 %v1127
    %1239 = vmatprep.subr.bf16.mxu0 %v1136
    %1240 = vmatpush1.bf16.msra.mxu0 %v1135
    %1241 = vmatprep.subr.bf16.mxu0 %v1144
    %1242 = vmatpush1.bf16.msra.mxu0 %v1143
    %1243 = vmatprep.subr.bf16.mxu0 %v1152
    %1244 = vmatpush1.bf16.msra.mxu0 %v1151
    %1245 = vmatprep.subr.bf16.mxu0 %v1160
    %1246 = vmatpush1.bf16.msra.mxu0 %v1159
    %1247 = vmatprep.subr.bf16.mxu0 0
    %1248 = vmatpush1.bf16.msra.mxu0 0
    %1249 = vmatprep.subr.bf16.mxu0 0
    %1250 = vmatpush1.bf16.msra.mxu0 0
    %1251 = vmatprep.subr.bf16.mxu0 0
    %1252 = vmatpush1.bf16.msra.mxu0 0
    %1253 = vmatprep.subr.bf16.mxu0 0
    %1254 = vmatpush1.bf16.msra.mxu0 0
    %1255 = vmatprep.subr.bf16.mxu0 0
    %1256 = vmatpush1.bf16.msra.mxu0 0
    %1257 = vmatprep.subr.bf16.mxu0 0
    %1258 = vmatpush1.bf16.msra.mxu0 0
    %1259 = vmatprep.subr.bf16.mxu0 0
    %1260 = vmatpush1.bf16.msra.mxu0 0
    %1261 = vmatprep.subr.bf16.mxu0 0
    %1262 = vmatpush1.bf16.msra.mxu0 0
    %1263 = vmatprep.mubr.bf16.mxu0 0
    %1264 = vmatmul.mubr.bf16.gmra.mrb[0].mxu0 %v804
    %v1265 = vpop.f32.mrb[0].mxu0
    %v1266 = vadd.f32 %v874, %v1265
    %v1267 = vpop.f32.mrb[0].mxu0
    %v1268 = vadd.f32 %v878, %v1267
    %v1269 = vpop.f32.mrb[0].mxu0
    %v1270 = vpop.f32.mrb[0].mxu0
    %1271 = vdwg.mxu0
    %1272 = vmatprep.subr.bf16.mxu0 %v1106
    %1273 = vmatpush1.bf16.msra.mxu0 %v1105
    %1274 = vmatprep.subr.bf16.mxu0 %v1114
    %1275 = vmatpush1.bf16.msra.mxu0 %v1113
    %1276 = vmatprep.subr.bf16.mxu0 %v1122
    %1277 = vmatpush1.bf16.msra.mxu0 %v1121
    %1278 = vmatprep.subr.bf16.mxu0 %v1130
    %1279 = vmatpush1.bf16.msra.mxu0 %v1129
    %1280 = vmatprep.subr.bf16.mxu0 %v1138
    %1281 = vmatpush1.bf16.msra.mxu0 %v1137
    %1282 = vmatprep.subr.bf16.mxu0 %v1146
    %1283 = vmatpush1.bf16.msra.mxu0 %v1145
    %1284 = vmatprep.subr.bf16.mxu0 %v1154
    %1285 = vmatpush1.bf16.msra.mxu0 %v1153
    %1286 = vmatprep.subr.bf16.mxu0 %v1162
    %1287 = vmatpush1.bf16.msra.mxu0 %v1161
    %1288 = vmatprep.subr.bf16.mxu0 0
    %1289 = vmatpush1.bf16.msra.mxu0 0
    %1290 = vmatprep.subr.bf16.mxu0 0
    %1291 = vmatpush1.bf16.msra.mxu0 0
    %1292 = vmatprep.subr.bf16.mxu0 0
    %1293 = vmatpush1.bf16.msra.mxu0 0
    %1294 = vmatprep.subr.bf16.mxu0 0
    %1295 = vmatpush1.bf16.msra.mxu0 0
    %1296 = vmatprep.subr.bf16.mxu0 0
    %1297 = vmatpush1.bf16.msra.mxu0 0
    %1298 = vmatprep.subr.bf16.mxu0 0
    %1299 = vmatpush1.bf16.msra.mxu0 0
    %1300 = vmatprep.subr.bf16.mxu0 0
    %1301 = vmatpush1.bf16.msra.mxu0 0
    %1302 = vmatprep.subr.bf16.mxu0 0
    %1303 = vmatpush1.bf16.msra.mxu0 0
    %1304 = vmatprep.mubr.bf16.mxu0 0
    %1305 = vmatmul.mubr.bf16.gmra.mrb[0].mxu0 %v804
    %v1306 = vpop.f32.mrb[0].mxu0
    %v1307 = vadd.f32 %v882, %v1306
    %v1308 = vpop.f32.mrb[0].mxu0
    %v1309 = vadd.f32 %v886, %v1308
    %v1310 = vpop.f32.mrb[0].mxu0
    %v1311 = vpop.f32.mrb[0].mxu0
    %1312 = vdwg.mxu0
    %1313 = vmatprep.subr.bf16.mxu0 %v1108
    %1314 = vmatpush1.bf16.msra.mxu0 %v1107
    %1315 = vmatprep.subr.bf16.mxu0 %v1116
    %1316 = vmatpush1.bf16.msra.mxu0 %v1115
    %1317 = vmatprep.subr.bf16.mxu0 %v1124
    %1318 = vmatpush1.bf16.msra.mxu0 %v1123
    %1319 = vmatprep.subr.bf16.mxu0 %v1132
    %1320 = vmatpush1.bf16.msra.mxu0 %v1131
    %1321 = vmatprep.subr.bf16.mxu0 %v1140
    %1322 = vmatpush1.bf16.msra.mxu0 %v1139
    %1323 = vmatprep.subr.bf16.mxu0 %v1148
    %1324 = vmatpush1.bf16.msra.mxu0 %v1147
    %1325 = vmatprep.subr.bf16.mxu0 %v1156
    %1326 = vmatpush1.bf16.msra.mxu0 %v1155
    %1327 = vmatprep.subr.bf16.mxu0 %v1164
    %1328 = vmatpush1.bf16.msra.mxu0 %v1163
    %1329 = vmatprep.subr.bf16.mxu0 0
    %1330 = vmatpush1.bf16.msra.mxu0 0
    %1331 = vmatprep.subr.bf16.mxu0 0
    %1332 = vmatpush1.bf16.msra.mxu0 0
    %1333 = vmatprep.subr.bf16.mxu0 0
    %1334 = vmatpush1.bf16.msra.mxu0 0
    %1335 = vmatprep.subr.bf16.mxu0 0
    %1336 = vmatpush1.bf16.msra.mxu0 0
    %1337 = vmatprep.subr.bf16.mxu0 0
    %1338 = vmatpush1.bf16.msra.mxu0 0
    %1339 = vmatprep.subr.bf16.mxu0 0
    %1340 = vmatpush1.bf16.msra.mxu0 0
    %1341 = vmatprep.subr.bf16.mxu0 0
    %1342 = vmatpush1.bf16.msra.mxu0 0
    %1343 = vmatprep.subr.bf16.mxu0 0
    %1344 = vmatpush1.bf16.msra.mxu0 0
    %1345 = vmatprep.mubr.bf16.mxu0 0
    %1346 = vmatmul.mubr.bf16.gmra.mrb[0].mxu0 %v804
    %v1347 = vpop.f32.mrb[0].mxu0
    %v1348 = vadd.f32 %v890, %v1347
    %v1349 = vpop.f32.mrb[0].mxu0
    %v1350 = vadd.f32 %v894, %v1349
    %v1351 = vpop.f32.mrb[0].mxu0
    %v1352 = vpop.f32.mrb[0].mxu0
    %1353 = vdwg.mxu0
    %1354 = vmatprep.subr.bf16.mxu0 %v1110
    %1355 = vmatpush1.bf16.msra.mxu0 %v1109
    %1356 = vmatprep.subr.bf16.mxu0 %v1118
    %1357 = vmatpush1.bf16.msra.mxu0 %v1117
    %1358 = vmatprep.subr.bf16.mxu0 %v1126
    %1359 = vmatpush1.bf16.msra.mxu0 %v1125
    %1360 = vmatprep.subr.bf16.mxu0 %v1134
    %1361 = vmatpush1.bf16.msra.mxu0 %v1133
    %1362 = vmatprep.subr.bf16.mxu0 %v1142
    %1363 = vmatpush1.bf16.msra.mxu0 %v1141
    %1364 = vmatprep.subr.bf16.mxu0 %v1150
    %1365 = vmatpush1.bf16.msra.mxu0 %v1149
    %1366 = vmatprep.subr.bf16.mxu0 %v1158
    %1367 = vmatpush1.bf16.msra.mxu0 %v1157
    %1368 = vmatprep.subr.bf16.mxu0 %v1166
    %1369 = vmatpush1.bf16.msra.mxu0 %v1165
    %1370 = vmatprep.subr.bf16.mxu0 0
    %1371 = vmatpush1.bf16.msra.mxu0 0
    %1372 = vmatprep.subr.bf16.mxu0 0
    %1373 = vmatpush1.bf16.msra.mxu0 0
    %1374 = vmatprep.subr.bf16.mxu0 0
    %1375 = vmatpush1.bf16.msra.mxu0 0
    %1376 = vmatprep.subr.bf16.mxu0 0
    %1377 = vmatpush1.bf16.msra.mxu0 0
    %1378 = vmatprep.subr.bf16.mxu0 0
    %1379 = vmatpush1.bf16.msra.mxu0 0
    %1380 = vmatprep.subr.bf16.mxu0 0
    %1381 = vmatpush1.bf16.msra.mxu0 0
    %1382 = vmatprep.subr.bf16.mxu0 0
    %1383 = vmatpush1.bf16.msra.mxu0 0
    %1384 = vmatprep.subr.bf16.mxu0 0
    %1385 = vmatpush1.bf16.msra.mxu0 0
    %1386 = vmatprep.mubr.bf16.mxu0 0
    %1387 = vmatmul.mubr.bf16.gmra.mrb[0].mxu0 %v804
    %v1388 = vpop.f32.mrb[0].mxu0
    %v1389 = vadd.f32 %v898, %v1388
    %v1390 = vpop.f32.mrb[0].mxu0
    %v1391 = vadd.f32 %v902, %v1390
    %v1392 = vpop.f32.mrb[0].mxu0
    %v1393 = vpop.f32.mrb[0].mxu0
    %1394 = vdwg.mxu0
    %s1395 = smul.u32 0, 3
    %s1396 = sld [smem:[#allocation2 + %s1395]]
    %s1397 = sadd.s32 %s1395, 1
    %s1398 = sld [smem:[#allocation2 + %s1397]]
    %s1399 = sadd.s32 %s1395, 2
    %s1400 = sld [smem:[#allocation2 + %s1399]]
    %v1401 = vstv %s1396
    %v1402 = vmul.f32 %v1401, %v100
    %v1403 = vmul.f32 %v1401, %v101
    %v1404 = vmul.f32 %v1401, %v102
    %v1405 = vmul.f32 %v1401, %v103
    %v1406 = vmul.f32 %v1401, %v104
    %v1407 = vmul.f32 %v1401, %v105
    %v1408 = vmul.f32 %v1401, %v106
    %v1409 = vmul.f32 %v1401, %v107
    %v1410 = vstv %s1398
    %v1411 = vmul.f32 %v1410, %v1266
    %v1412 = vmul.f32 %v1410, %v1268
    %v1413 = vmul.f32 %v1410, %v1307
    %v1414 = vmul.f32 %v1410, %v1309
    %v1415 = vmul.f32 %v1410, %v1348
    %v1416 = vmul.f32 %v1410, %v1350
    %v1417 = vmul.f32 %v1410, %v1389
    %v1418 = vmul.f32 %v1410, %v1391
    %v1419 = vadd.f32 %v1402, %v1411
    %v1420 = vadd.f32 %v1403, %v1412
    %v1421 = vadd.f32 %v1404, %v1413
    %v1422 = vadd.f32 %v1405, %v1414
    %v1423 = vadd.f32 %v1406, %v1415
    %v1424 = vadd.f32 %v1407, %v1416
    %v1425 = vadd.f32 %v1408, %v1417
    %v1426 = vadd.f32 %v1409, %v1418
    %v1427 = vld [vmem:[%s2] sm:$0xff]
    %v1428 = vld [vmem:[%s2 + $0x8] sm:$0xff]
    %v1429 = vld [vmem:[%s2 + $0x10] sm:$0xff]
    %v1430 = vld [vmem:[%s2 + $0x18] sm:$0xff]
    %v1431 = vld [vmem:[%s2 + $0x20] sm:$0xff]
    %v1432 = vld [vmem:[%s2 + $0x28] sm:$0xff]
    %v1433 = vld [vmem:[%s2 + $0x30] sm:$0xff]
    %v1434 = vld [vmem:[%s2 + $0x38] sm:$0xff]
    %v1435 = vstv %s1400
    %v1436 = vmul.f32 %v1435, %v1427
    %v1437 = vmul.f32 %v1435, %v1428
    %v1438 = vmul.f32 %v1435, %v1429
    %v1439 = vmul.f32 %v1435, %v1430
    %v1440 = vmul.f32 %v1435, %v1431
    %v1441 = vmul.f32 %v1435, %v1432
    %v1442 = vmul.f32 %v1435, %v1433
    %v1443 = vmul.f32 %v1435, %v1434
    %v1444 = vadd.f32 %v1419, %v1436
    %v1445 = vadd.f32 %v1420, %v1437
    %v1446 = vadd.f32 %v1421, %v1438
    %v1447 = vadd.f32 %v1422, %v1439
    %v1448 = vadd.f32 %v1423, %v1440
    %v1449 = vadd.f32 %v1424, %v1441
    %v1450 = vadd.f32 %v1425, %v1442
    %v1451 = vadd.f32 %v1426, %v1443
    %1452 = vst [vmem:[#allocation10] sm:$0xff] %v1444
    %1453 = vst [vmem:[#allocation10 + $0x8] sm:$0xff] %v1445
    %1454 = vst [vmem:[#allocation10 + $0x10] sm:$0xff] %v1446
    %1455 = vst [vmem:[#allocation10 + $0x18] sm:$0xff] %v1447
    %1456 = vst [vmem:[#allocation10 + $0x20] sm:$0xff] %v1448
    %1457 = vst [vmem:[#allocation10 + $0x28] sm:$0xff] %v1449
    %1458 = vst [vmem:[#allocation10 + $0x30] sm:$0xff] %v1450
    %1459 = vst [vmem:[#allocation10 + $0x38] sm:$0xff] %v1451
    // Predicated region
    $region50: #{tpu_custom_call.1} parent=1 // pred_check
      _
    $region51: #{tpu_custom_call.1} parent=1 // pred_check_branch
      %1461 = sbr.rel (0) target = $region53
    $region52: #{tpu_custom_call.1} parent=1 // pred_region
      %s1463 = ssub.s32 1024, 1024
      %1464 = vsyncadd [#allocation4], %s1463
      %s1466 = sshll.u32 [#allocation10], 4
      %s1467 = int_to_ptr.vmem [resolvable:$true] %s1466
      %1469 = dma.vmem_to_hbm [thread:$0]  %s1467, 1024, %s7, [#allocation4]
    $region53: #{tpu_custom_call.1} parent=1 // pred_fallthru
      _
    // Predicated region
    $region54: #{tpu_custom_call.1} parent=1 // pred_check
      _
    $region55: #{tpu_custom_call.1} parent=1 // pred_check_branch
      %1471 = sbr.rel (0) target = $region57
    $region56: #{tpu_custom_call.1} parent=1 // pred_region
      %1472 = dma.done [#allocation4], 1024
    $region57: #{tpu_custom_call.1} parent=1 // pred_fallthru
      _
    %1473 = vsyncpa [#allocation3], 1
    %1474 = vsyncpa [#allocation8], 1
    %1475 = vsyncpa [#allocation4], 1
    %1476 = vsyncpa [#allocation5], 1

</llo_original>
